<compile_context>
chip_gen: v5e
topology: v5e:2x2
jax: 0.10.0
libtpu: 0.0.40
codegen_flags: <defaults>
</compile_context>

<pallas_src>
import jax
import jax.numpy as jnp
from jax.experimental import pallas as pl
from jax.experimental.pallas import tpu as pltpu


def _round_up(x: int, m: int) -> int:
    return ((x + m - 1) // m) * m


def _vmem_capacity_bytes() -> int:
    """Best-effort query of per-core VMEM capacity; conservative fallback."""
    try:
        info = pltpu.get_tpu_info()
        for name in ("vmem_capacity_bytes", "vmem_size_bytes", "vmem_bytes"):
            cap = getattr(info, name, None)
            if cap:
                return int(cap)
    except Exception:
        pass
    return 64 * 1024 * 1024   # v7x per-TensorCore VMEM (smallest of the three)


def _mbf_kernel(x_ref, w12_ref, b12_ref, w3_ref, b3_ref, out_ref):
    """One N-tile: relu(relu(x @ blockdiag(W1s,W2s) split-> h1*h2) @ W3s + b3)."""
    kp = w3_ref.shape[0]                              # Kp, multiple of 128
    # Fused first stage: single 2*Kp-lane MXU matmul, f32 accumulation.
    h12 = jnp.dot(x_ref[...], w12_ref[...],
                  preferred_element_type=jnp.float32) + b12_ref[...]
    # Static, vreg-aligned lane slices recover the two branch stacks.
    h1 = h12[:, :kp]
    h2 = h12[:, kp:]
    # relu(fc_1 * fc_2) on the VPU in f32, materialized once in the matmul dtype.
    h = jnp.maximum(h1 * h2, 0.0).astype(w3_ref.dtype)        # (tn, Kp)
    # Second stage; contracting over Kp also performs the sum over branches.
    out = jnp.dot(h, w3_ref[...],
                  preferred_element_type=jnp.float32) + b3_ref[...]
    out_ref[...] = jnp.maximum(out, 0.0).astype(out_ref.dtype)


def multi_branch_fusion(appearance, spatial, params, *,
                        tile_n: int = 1024,
                        weight_dtype=jnp.bfloat16,
                        out_dtype=jnp.float32):
    """appearance: [N, A], spatial: [N, Sp]  ->  [N, R] (== PyTorch forward)."""
    w1, b1, w2, b2, w3, b3 = (params[k] for k in ("w1", "b1", "w2", "b2", "w3", "b3"))
    C, A, sub = w1.shape
    Sp = w2.shape[1]
    R = w3.shape[2]
    N = appearance.shape[0]
    K = C * sub
    Kp = _round_up(K, 128)
    d_in = A + Sp
    compute_dtype = jnp.dtype(weight_dtype) if weight_dtype is not None else jnp.dtype(jnp.float32)

    # --- one-time weight restructuring (branch axis folded into lanes) ------
    # W1s[a, c*sub+j] = w1[c, a, j];  W3s[c*sub+j, r] = w3[c, j, r].
    w1s = jnp.transpose(w1, (1, 0, 2)).reshape(A, K)
    w2s = jnp.transpose(w2, (1, 0, 2)).reshape(Sp, K)
    w3s = w3.reshape(K, R)
    b1s = b1.reshape(K)
    b2s = b2.reshape(K)
    b3s = jnp.sum(b3, axis=0).reshape(1, R).astype(jnp.float32)   # sum_c b3[c]

    # Block-diagonal first-stage weight: [app|spatial] @ W12 == [H1 | H2],
    # each half padded to Kp lanes so the in-kernel slices are vreg aligned.
    w12 = jnp.zeros((d_in, 2 * Kp), jnp.float32)
    w12 = w12.at[:A, :K].set(w1s)
    w12 = w12.at[A:, Kp:Kp + K].set(w2s)
    b12 = jnp.zeros((1, 2 * Kp), jnp.float32)
    b12 = b12.at[0, :K].set(b1s)
    b12 = b12.at[0, Kp:Kp + K].set(b2s)
    w3p = jnp.zeros((Kp, R), jnp.float32).at[:K, :].set(w3s)

    # bf16 MXU operands by default; accumulation stays f32 inside the kernel.
    w12 = w12.astype(compute_dtype)
    w3p = w3p.astype(compute_dtype)
    x = jnp.concatenate([appearance, spatial], axis=1).astype(compute_dtype)

    # --- N tiling: large tiles, >=2 grid steps when possible (v7x 2 TCs) ----
    n8 = _round_up(max(N, 1), 8)
    tn = min(tile_n, n8)
    if n8 >= 16 and -(-n8 // tn) < 2:
        tn = _round_up(-(-n8 // 2), 8)

    # --- VMEM budget: shrink tile if needed, set vmem_limit explicitly ------
    in_b = jnp.dtype(compute_dtype).itemsize
    out_b = jnp.dtype(out_dtype).itemsize

    def _vmem_estimate(t):
        io = 2 * t * d_in * in_b + 2 * t * R * out_b                 # double-buffered tiles
        wts = 2 * (d_in * 2 * Kp * in_b + 2 * Kp * 4 + Kp * R * in_b + R * 4)
        mid = t * 2 * Kp * 4 + t * Kp * in_b + t * R * 4             # h12, h, out
        return io + wts + mid

    cap = _vmem_capacity_bytes()
    budget = int(0.75 * cap)
    while tn > 8 and _vmem_estimate(tn) > budget:
        tn = max(8, _round_up(tn // 2, 8))
    vmem_limit = int(min(0.9 * cap, max(32 * 1024 * 1024, 2 * _vmem_estimate(tn))))

    n_pad = _round_up(n8, tn)
    if n_pad != N:
        x = jnp.pad(x, ((0, n_pad - N), (0, 0)))
    grid = (n_pad // tn,)

    def build(single_buffer_weights: bool):
        w_mode = dict(pipeline_mode=pl.Buffered(1)) if single_buffer_weights else {}
        return pl.pallas_call(
            _mbf_kernel,
            out_shape=jax.ShapeDtypeStruct((n_pad, R), out_dtype),
            grid=grid,
            in_specs=[
                pl.BlockSpec((tn, d_in), lambda i: (i, 0)),
                pl.BlockSpec((d_in, 2 * Kp), lambda i: (0, 0), **w_mode),
                pl.BlockSpec((1, 2 * Kp), lambda i: (0, 0), **w_mode),
                pl.BlockSpec((Kp, R), lambda i: (0, 0), **w_mode),
                pl.BlockSpec((1, R), lambda i: (0, 0), **w_mode),
            ],
            out_specs=pl.BlockSpec((tn, R), lambda i: (i, 0)),
            compiler_params=pltpu.CompilerParams(
                dimension_semantics=("parallel",),
                vmem_limit_bytes=vmem_limit,
            ),
        )

    args = (x, w12, b12, w3p, b3s)
    try:
        out = build(True)(*args)    # grid-invariant weights single-buffered
    except Exception:
        # This JAX/libtpu build rejected pipeline_mode=pl.Buffered(1);
        # fall back to default double-buffering of the invariant weights.
        out = build(False)(*args)

    return out[:N, :]


def init_params(key, appearance_size, spatial_size, representation_size, cardinality):
    sub = representation_size // cardinality
    assert sub * cardinality == representation_size
    ks = jax.random.split(key, 6)
    scale = 0.05
    return {
        "w1": scale * jax.random.normal(ks[0], (cardinality, appearance_size, sub), jnp.float32),
        "b1": scale * jax.random.normal(ks[1], (cardinality, 1, sub), jnp.float32),
        "w2": scale * jax.random.normal(ks[2], (cardinality, spatial_size, sub), jnp.float32),
        "b2": scale * jax.random.normal(ks[3], (cardinality, 1, sub), jnp.float32),
        "w3": scale * jax.random.normal(ks[4], (cardinality, sub, representation_size), jnp.float32),
        "b3": scale * jax.random.normal(ks[5], (cardinality, 1, representation_size), jnp.float32),
    }


def reference(appearance, spatial, params):
    # Pure-JAX reference mirroring the PyTorch forward.
    outs = []
    C = params["w1"].shape[0]
    for c in range(C):
        h1 = appearance @ params["w1"][c] + params["b1"][c]
        h2 = spatial @ params["w2"][c] + params["b2"][c]
        h = jnp.maximum(h1 * h2, 0.0)
        outs.append(h @ params["w3"][c] + params["b3"][c])
    return jnp.maximum(jnp.stack(outs).sum(0), 0.0)


if __name__ == "__main__":
    key = jax.random.PRNGKey(0)
    k_app, k_spa, k_par = jax.random.split(key, 3)

    N = 8                      # batch (box-pair count)
    appearance_size = 32
    spatial_size = 36
    representation_size = 64
    cardinality = 4

    appearance = jax.random.normal(k_app, (N, appearance_size), jnp.float32)
    spatial = jax.random.normal(k_spa, (N, spatial_size), jnp.float32)
    params = init_params(k_par, appearance_size, spatial_size,
                         representation_size, cardinality)

    ref = reference(appearance, spatial, params)

    # Exact-semantics check: f32 operands must match the reference tightly.
    out_f32 = jax.block_until_ready(
        multi_branch_fusion(appearance, spatial, params, weight_dtype=None))
    assert out_f32.shape == (N, representation_size)
    assert jnp.allclose(out_f32, ref, atol=1e-5, rtol=1e-5), "f32 mismatch vs reference"

    # Default perf config: bf16 MXU operands, f32 accumulation (looser tol).
    out_bf16 = jax.block_until_ready(
        multi_branch_fusion(appearance, spatial, params))
    assert out_bf16.shape == (N, representation_size)
    assert jnp.allclose(out_bf16, ref, atol=2e-2, rtol=2e-2), "bf16 mismatch vs reference"

    print("KERNEL_OK")
</pallas_src>

<mosaic_0001>
module attributes {stable_mosaic.version = 11 : i64} {
  func.func @_mbf_kernel(%arg0: i32, %arg1: memref<8x68xf32, #tpu.memory_space<vmem>>, %arg2: memref<68x256xf32, #tpu.memory_space<vmem>>, %arg3: memref<1x256xf32, #tpu.memory_space<vmem>>, %arg4: memref<128x64xf32, #tpu.memory_space<vmem>>, %arg5: memref<1x64xf32, #tpu.memory_space<vmem>>, %arg6: memref<8x64xf32, #tpu.memory_space<vmem>>) attributes {dimension_semantics = [#tpu.dimension_semantics<parallel>], iteration_bounds = array<i64: 1>, scalar_prefetch = 0 : i64, scratch_operands = 0 : i64, tpu.core_type = #tpu.core_type<tc>, window_params = [{transform_indices = @transform_0, window_bounds = array<i64: 8, 68>}, {pipeline_mode = #tpu.pipeline_mode<synchronous>, transform_indices = @transform_1, window_bounds = array<i64: 68, 256>}, {pipeline_mode = #tpu.pipeline_mode<synchronous>, transform_indices = @transform_2, window_bounds = array<i64: 1, 256>}, {pipeline_mode = #tpu.pipeline_mode<synchronous>, transform_indices = @transform_3, window_bounds = array<i64: 128, 64>}, {pipeline_mode = #tpu.pipeline_mode<synchronous>, transform_indices = @transform_4, window_bounds = array<i64: 1, 64>}, {transform_indices = @transform_5, window_bounds = array<i64: 8, 64>}]} {
    %c0 = arith.constant 0 : index
    %c0_0 = arith.constant 0 : index
    %0 = vector.load %arg1[%c0, %c0_0] : memref<8x68xf32, #tpu.memory_space<vmem>>, vector<8x68xf32>
    %c0_1 = arith.constant 0 : index
    %c0_2 = arith.constant 0 : index
    %1 = vector.load %arg2[%c0_1, %c0_2] : memref<68x256xf32, #tpu.memory_space<vmem>>, vector<68x256xf32>
    %cst = arith.constant dense<0.000000e+00> : vector<8x256xf32>
    %2 = tpu.matmul %0, %1, %cst {dimension_numbers = #tpu.dot_dimension_numbers<[1], [0], [0], [1], [0, 0, 1, 1], [], []>} : vector<8x68xf32>, vector<68x256xf32>, vector<8x256xf32> -> vector<8x256xf32>
    %c0_3 = arith.constant 0 : index
    %c0_4 = arith.constant 0 : index
    %3 = vector.load %arg3[%c0_3, %c0_4] : memref<1x256xf32, #tpu.memory_space<vmem>>, vector<1x256xf32>
    %4 = vector.broadcast %3 : vector<1x256xf32> to vector<8x256xf32>
    %5 = arith.addf %2, %4 : vector<8x256xf32>
    %6 = vector.extract_strided_slice %5 {offsets = [0, 0], sizes = [8, 128], strides = [1, 1]} : vector<8x256xf32> to vector<8x128xf32>
    %7 = vector.extract_strided_slice %5 {offsets = [0, 128], sizes = [8, 128], strides = [1, 1]} : vector<8x256xf32> to vector<8x128xf32>
    %8 = arith.mulf %6, %7 : vector<8x128xf32>
    %cst_5 = arith.constant 0.000000e+00 : f32
    %9 = vector.broadcast %cst_5 : f32 to vector<8x128xf32>
    %10 = arith.maximumf %8, %9 : vector<8x128xf32>
    %c0_6 = arith.constant 0 : index
    %c0_7 = arith.constant 0 : index
    %11 = vector.load %arg4[%c0_6, %c0_7] : memref<128x64xf32, #tpu.memory_space<vmem>>, vector<128x64xf32>
    %cst_8 = arith.constant dense<0.000000e+00> : vector<8x64xf32>
    %12 = tpu.matmul %10, %11, %cst_8 {dimension_numbers = #tpu.dot_dimension_numbers<[1], [0], [0], [1], [0, 0, 1, 1], [], []>} : vector<8x128xf32>, vector<128x64xf32>, vector<8x64xf32> -> vector<8x64xf32>
    %c0_9 = arith.constant 0 : index
    %c0_10 = arith.constant 0 : index
    %13 = vector.load %arg5[%c0_9, %c0_10] : memref<1x64xf32, #tpu.memory_space<vmem>>, vector<1x64xf32>
    %14 = vector.broadcast %13 : vector<1x64xf32> to vector<8x64xf32>
    %15 = arith.addf %12, %14 : vector<8x64xf32>
    %cst_11 = arith.constant 0.000000e+00 : f32
    %16 = vector.broadcast %cst_11 : f32 to vector<8x64xf32>
    %17 = arith.maximumf %15, %16 : vector<8x64xf32>
    %c0_12 = arith.constant 0 : index
    %c0_13 = arith.constant 0 : index
    %18 = vector.load %arg6[%c0_12, %c0_13] : memref<8x64xf32, #tpu.memory_space<vmem>>, vector<8x64xf32>
    tpu.vector_store %arg6[%c0_12, %c0_13], %17 {strides = array<i32>} : memref<8x64xf32, #tpu.memory_space<vmem>>, vector<8x64xf32>,
    return
  }
  func.func @transform_0(%arg0: i32) -> (i32, i32) {
    %c0_i32 = arith.constant 0 : i32
    %c0_i32_0 = arith.constant 0 : i32
    return %arg0, %c0_i32 : i32, i32
  }
  func.func @transform_1(%arg0: i32) -> (i32, i32) {
    %c0_i32 = arith.constant 0 : i32
    %c0_i32_0 = arith.constant 0 : i32
    %c0_i32_1 = arith.constant 0 : i32
    return %c0_i32, %c0_i32_0 : i32, i32
  }
  func.func @transform_2(%arg0: i32) -> (i32, i32) {
    %c0_i32 = arith.constant 0 : i32
    %c0_i32_0 = arith.constant 0 : i32
    %c0_i32_1 = arith.constant 0 : i32
    return %c0_i32, %c0_i32_0 : i32, i32
  }
  func.func @transform_3(%arg0: i32) -> (i32, i32) {
    %c0_i32 = arith.constant 0 : i32
    %c0_i32_0 = arith.constant 0 : i32
    %c0_i32_1 = arith.constant 0 : i32
    return %c0_i32, %c0_i32_0 : i32, i32
  }
  func.func @transform_4(%arg0: i32) -> (i32, i32) {
    %c0_i32 = arith.constant 0 : i32
    %c0_i32_0 = arith.constant 0 : i32
    %c0_i32_1 = arith.constant 0 : i32
    return %c0_i32, %c0_i32_0 : i32, i32
  }
  func.func @transform_5(%arg0: i32) -> (i32, i32) {
    %c0_i32 = arith.constant 0 : i32
    %c0_i32_0 = arith.constant 0 : i32
    return %arg0, %c0_i32 : i32, i32
  }
}

module attributes {stable_mosaic.version = 11 : i64} {
  func.func @_mbf_kernel(%arg0: i32, %arg1: memref<8x68xf32, #tpu.memory_space<vmem>>, %arg2: memref<68x256xf32, #tpu.memory_space<vmem>>, %arg3: memref<1x256xf32, #tpu.memory_space<vmem>>, %arg4: memref<128x64xf32, #tpu.memory_space<vmem>>, %arg5: memref<1x64xf32, #tpu.memory_space<vmem>>, %arg6: memref<8x64xf32, #tpu.memory_space<vmem>>) attributes {dimension_semantics = [#tpu.dimension_semantics<parallel>], iteration_bounds = array<i64: 1>, scalar_prefetch = 0 : i64, scratch_operands = 0 : i64, tpu.core_type = #tpu.core_type<tc>, window_params = [{transform_indices = @transform_0, window_bounds = array<i64: 8, 68>}, {pipeline_mode = #tpu.pipeline_mode<synchronous>, transform_indices = @transform_1, window_bounds = array<i64: 68, 256>}, {pipeline_mode = #tpu.pipeline_mode<synchronous>, transform_indices = @transform_2, window_bounds = array<i64: 1, 256>}, {pipeline_mode = #tpu.pipeline_mode<synchronous>, transform_indices = @transform_3, window_bounds = array<i64: 128, 64>}, {pipeline_mode = #tpu.pipeline_mode<synchronous>, transform_indices = @transform_4, window_bounds = array<i64: 1, 64>}, {transform_indices = @transform_5, window_bounds = array<i64: 8, 64>}]} {
    %c0 = arith.constant 0 : index
    %c0_0 = arith.constant 0 : index
    %0 = vector.load %arg1[%c0, %c0_0] : memref<8x68xf32, #tpu.memory_space<vmem>>, vector<8x68xf32>
    %c0_1 = arith.constant 0 : index
    %c0_2 = arith.constant 0 : index
    %1 = vector.load %arg2[%c0_1, %c0_2] : memref<68x256xf32, #tpu.memory_space<vmem>>, vector<68x256xf32>
    %cst = arith.constant dense<0.000000e+00> : vector<8x256xf32>
    %2 = tpu.matmul %0, %1, %cst {dimension_numbers = #tpu.dot_dimension_numbers<[1], [0], [0], [1], [0, 0, 1, 1], [], []>} : vector<8x68xf32>, vector<68x256xf32>, vector<8x256xf32> -> vector<8x256xf32>
    %c0_3 = arith.constant 0 : index
    %c0_4 = arith.constant 0 : index
    %3 = vector.load %arg3[%c0_3, %c0_4] : memref<1x256xf32, #tpu.memory_space<vmem>>, vector<1x256xf32>
    %4 = vector.broadcast %3 : vector<1x256xf32> to vector<8x256xf32>
    %5 = arith.addf %2, %4 : vector<8x256xf32>
    %6 = vector.extract_strided_slice %5 {offsets = [0, 0], sizes = [8, 128], strides = [1, 1]} : vector<8x256xf32> to vector<8x128xf32>
    %7 = vector.extract_strided_slice %5 {offsets = [0, 128], sizes = [8, 128], strides = [1, 1]} : vector<8x256xf32> to vector<8x128xf32>
    %8 = arith.mulf %6, %7 : vector<8x128xf32>
    %cst_5 = arith.constant 0.000000e+00 : f32
    %9 = vector.broadcast %cst_5 : f32 to vector<8x128xf32>
    %10 = arith.maximumf %8, %9 : vector<8x128xf32>
    %c0_6 = arith.constant 0 : index
    %c0_7 = arith.constant 0 : index
    %11 = vector.load %arg4[%c0_6, %c0_7] : memref<128x64xf32, #tpu.memory_space<vmem>>, vector<128x64xf32>
    %cst_8 = arith.constant dense<0.000000e+00> : vector<8x64xf32>
    %12 = tpu.matmul %10, %11, %cst_8 {dimension_numbers = #tpu.dot_dimension_numbers<[1], [0], [0], [1], [0, 0, 1, 1], [], []>} : vector<8x128xf32>, vector<128x64xf32>, vector<8x64xf32> -> vector<8x64xf32>
    %c0_9 = arith.constant 0 : index
    %c0_10 = arith.constant 0 : index
    %13 = vector.load %arg5[%c0_9, %c0_10] : memref<1x64xf32, #tpu.memory_space<vmem>>, vector<1x64xf32>
    %14 = vector.broadcast %13 : vector<1x64xf32> to vector<8x64xf32>
    %15 = arith.addf %12, %14 : vector<8x64xf32>
    %cst_11 = arith.constant 0.000000e+00 : f32
    %16 = vector.broadcast %cst_11 : f32 to vector<8x64xf32>
    %17 = arith.maximumf %15, %16 : vector<8x64xf32>
    %c0_12 = arith.constant 0 : index
    %c0_13 = arith.constant 0 : index
    %18 = vector.load %arg6[%c0_12, %c0_13] : memref<8x64xf32, #tpu.memory_space<vmem>>, vector<8x64xf32>
    tpu.vector_store %arg6[%c0_12, %c0_13], %17 {strides = array<i32>} : memref<8x64xf32, #tpu.memory_space<vmem>>, vector<8x64xf32>,
    return
  }
  func.func @transform_0(%arg0: i32) -> (i32, i32) {
    %c0_i32 = arith.constant 0 : i32
    %c0_i32_0 = arith.constant 0 : i32
    return %arg0, %c0_i32 : i32, i32
  }
  func.func @transform_1(%arg0: i32) -> (i32, i32) {
    %c0_i32 = arith.constant 0 : i32
    %c0_i32_0 = arith.constant 0 : i32
    %c0_i32_1 = arith.constant 0 : i32
    return %c0_i32, %c0_i32_0 : i32, i32
  }
  func.func @transform_2(%arg0: i32) -> (i32, i32) {
    %c0_i32 = arith.constant 0 : i32
    %c0_i32_0 = arith.constant 0 : i32
    %c0_i32_1 = arith.constant 0 : i32
    return %c0_i32, %c0_i32_0 : i32, i32
  }
  func.func @transform_3(%arg0: i32) -> (i32, i32) {
    %c0_i32 = arith.constant 0 : i32
    %c0_i32_0 = arith.constant 0 : i32
    %c0_i32_1 = arith.constant 0 : i32
    return %c0_i32, %c0_i32_0 : i32, i32
  }
  func.func @transform_4(%arg0: i32) -> (i32, i32) {
    %c0_i32 = arith.constant 0 : i32
    %c0_i32_0 = arith.constant 0 : i32
    %c0_i32_1 = arith.constant 0 : i32
    return %c0_i32, %c0_i32_0 : i32, i32
  }
  func.func @transform_5(%arg0: i32) -> (i32, i32) {
    %c0_i32 = arith.constant 0 : i32
    %c0_i32_0 = arith.constant 0 : i32
    return %arg0, %c0_i32 : i32, i32
  }
}

</mosaic_0001>

<llo_original>
// kernel: tpu_custom_call.1
$region0: #{tpu_custom_call.1}
  #allocation0 [shape = 'u32[]', space=smem, size = 0x4, offset = 0x4, fixed_abs, tag = 'smem constant byte address 0x4 - core index']
  #allocation1 [shape = 'u32[72,128]{1,0:T(1,128)}', space=vmem, size = 0x9000, scoped, tag = 'internal scratch']
  %s0 = inlined_call_operand.vmem [shape: f32[8,68], index: 0, kind: input, shape index: {}]
  %s1 = inlined_call_operand.vmem [shape: f32[68,256], index: 1, kind: input, shape index: {}]
  %s2 = inlined_call_operand.vmem [shape: f32[1,256], index: 2, kind: input, shape index: {}]
  %s3 = inlined_call_operand.vmem [shape: f32[128,64], index: 3, kind: input, shape index: {}]
  %s4 = inlined_call_operand.vmem [shape: f32[1,64], index: 4, kind: input, shape index: {}]
  %s5 = inlined_call_operand.hbm [shape: f32[8,64], index: 5, kind: output, shape index: {}]
  %s6 = sld [smem:[#allocation0]]
  $region30: #{tpu_custom_call.1} parent=0
    _
  %s8 = ssub.s32 1, %s6
  %s9 = scalar_select 0, %s8, %s6
  $region1: #{tpu_custom_call.1} parent=0
    #allocation2 [shape = 'u8[4096]{0}', space=vmem, size = 0x1000, scoped, tag = 'output window, operand 0, single buffered']
    #allocation3 [shape = 's32[1]{0}', space=sflag, size = 0x4, scoped, tag = 'scoped memory for tpu_custom_call.1']
    %10 = vsyncpa [#allocation3], 0
    // Predicated region
    $region2: #{tpu_custom_call.1} parent=1 // pred_check
      _
    $region3: #{tpu_custom_call.1} parent=1 // pred_check_branch
      %12 = sbr.rel (0) target = $region5
    $region4: #{tpu_custom_call.1} parent=1 // pred_region
      _
    $region5: #{tpu_custom_call.1} parent=1 // pred_fallthru
      _
    // Predicated region
    $region6: #{tpu_custom_call.1} parent=1 // pred_check
      _
    $region7: #{tpu_custom_call.1} parent=1 // pred_check_branch
      %14 = sbr.rel (0) target = $region9
    $region8: #{tpu_custom_call.1} parent=1 // pred_region
      _
    $region9: #{tpu_custom_call.1} parent=1 // pred_fallthru
      _
    // Predicated region
    $region10: #{tpu_custom_call.1} parent=1 // pred_check
      _
    $region11: #{tpu_custom_call.1} parent=1 // pred_check_branch
      %16 = sbr.rel (0) target = $region13
    $region12: #{tpu_custom_call.1} parent=1 // pred_region
      _
    $region13: #{tpu_custom_call.1} parent=1 // pred_fallthru
      _
    // Predicated region
    $region14: #{tpu_custom_call.1} parent=1 // pred_check
      _
    $region15: #{tpu_custom_call.1} parent=1 // pred_check_branch
      %18 = sbr.rel (0) target = $region17
    $region16: #{tpu_custom_call.1} parent=1 // pred_region
      _
    $region17: #{tpu_custom_call.1} parent=1 // pred_fallthru
      _
    // Predicated region
    $region18: #{tpu_custom_call.1} parent=1 // pred_check
      _
    $region19: #{tpu_custom_call.1} parent=1 // pred_check_branch
      %20 = sbr.rel (0) target = $region21
    $region20: #{tpu_custom_call.1} parent=1 // pred_region
      _
    $region21: #{tpu_custom_call.1} parent=1 // pred_fallthru
      _
    %v21 = vld [vmem:[%s0] sm:$0xff]
    %v22 = vld [vmem:[%s1] sm:$0xff]
    %v23 = vld [vmem:[%s1 + $0x8] sm:$0xff]
    %v24 = vld [vmem:[%s1 + $0x10] sm:$0xff]
    %v25 = vld [vmem:[%s1 + $0x18] sm:$0xff]
    %v26 = vld [vmem:[%s1 + $0x20] sm:$0xff]
    %v27 = vld [vmem:[%s1 + $0x28] sm:$0xff]
    %v28 = vld [vmem:[%s1 + $0x30] sm:$0xff]
    %v29 = vld [vmem:[%s1 + $0x38] sm:$0xff]
    %v30 = vld [vmem:[%s1 + $0x40] sm:$0xff]
    %v31 = vld [vmem:[%s1 + $0x48] sm:$0xff]
    %v32 = vld [vmem:[%s1 + $0x50] sm:$0xff]
    %v33 = vld [vmem:[%s1 + $0x58] sm:$0xff]
    %v34 = vld [vmem:[%s1 + $0x60] sm:$0xff]
    %v35 = vld [vmem:[%s1 + $0x68] sm:$0xff]
    %v36 = vld [vmem:[%s1 + $0x70] sm:$0xff]
    %v37 = vld [vmem:[%s1 + $0x78] sm:$0xff]
    %v38 = vld [vmem:[%s1 + $0x80] sm:$0xf]
    %v39 = vld [vmem:[%s1 + $0x88] sm:$0xf]
    %v40 = vld [vmem:[%s2] sm:$0x3]
    %v42 = vperm.slane %v40, 0
    %v43 = vperm.slane %v40, 1
    %vm46 = vcmask 556032
    %v48 = vsel %vm46, %v21, 0
    %vm50 = vcmask 1043456
    %v52 = vsel %vm50, %v38, 0
    %v55 = vsel %vm50, %v39, 0
    %57 = vmatpush.msra.mxu0 0.0
    %58 = vmatpush.msra.mxu0 0.0
    %59 = vmatpush.msra.mxu0 0.0
    %60 = vmatpush.msra.mxu0 0.0
    %61 = vmatpush.msra.mxu0 0.0
    %62 = vmatpush.msra.mxu0 0.0
    %63 = vmatpush.msra.mxu0 0.0
    %64 = vmatpush.msra.mxu0 %v52
    %65 = vmatpush.msra.mxu0 %v36
    %66 = vmatpush.msra.mxu0 %v34
    %67 = vmatpush.msra.mxu0 %v32
    %68 = vmatpush.msra.mxu0 %v30
    %69 = vmatpush.msra.mxu0 %v28
    %70 = vmatpush.msra.mxu0 %v26
    %71 = vmatpush.msra.mxu0 %v24
    %72 = vmatpush.msra.mxu0 %v22
    %73 = vmatmul.f32.gmra.mxu0 %v48
    %v74 = vpop.f32.mrf.mxu0
    %v75 = vadd.f32 %v42, %v74
    %76 = vdwg.mxu0
    %77 = vmatpush.msra.mxu0 0.0
    %78 = vmatpush.msra.mxu0 0.0
    %79 = vmatpush.msra.mxu0 0.0
    %80 = vmatpush.msra.mxu0 0.0
    %81 = vmatpush.msra.mxu0 0.0
    %82 = vmatpush.msra.mxu0 0.0
    %83 = vmatpush.msra.mxu0 0.0
    %84 = vmatpush.msra.mxu0 %v55
    %85 = vmatpush.msra.mxu0 %v37
    %86 = vmatpush.msra.mxu0 %v35
    %87 = vmatpush.msra.mxu0 %v33
    %88 = vmatpush.msra.mxu0 %v31
    %89 = vmatpush.msra.mxu0 %v29
    %90 = vmatpush.msra.mxu0 %v27
    %91 = vmatpush.msra.mxu0 %v25
    %92 = vmatpush.msra.mxu0 %v23
    %93 = vmatmul.f32.gmra.mxu0 %v48
    %v94 = vpop.f32.mrf.mxu0
    %v95 = vadd.f32 %v43, %v94
    %96 = vdwg.mxu0
    %v97 = vmul.f32 %v75, %v95
    %v98 = vmax.f32 %v97, 0.0
    %v99 = vld [vmem:[%s3] sm:$0xff]
    %v100 = vld [vmem:[%s3 + $0x8] sm:$0xff]
    %v101 = vld [vmem:[%s3 + $0x10] sm:$0xff]
    %v102 = vld [vmem:[%s3 + $0x18] sm:$0xff]
    %v103 = vld [vmem:[%s3 + $0x20] sm:$0xff]
    %v104 = vld [vmem:[%s3 + $0x28] sm:$0xff]
    %v105 = vld [vmem:[%s3 + $0x30] sm:$0xff]
    %v106 = vld [vmem:[%s3 + $0x38] sm:$0xff]
    %v107 = vld [vmem:[%s3 + $0x40] sm:$0xff]
    %v108 = vld [vmem:[%s3 + $0x48] sm:$0xff]
    %v109 = vld [vmem:[%s3 + $0x50] sm:$0xff]
    %v110 = vld [vmem:[%s3 + $0x58] sm:$0xff]
    %v111 = vld [vmem:[%s3 + $0x60] sm:$0xff]
    %v112 = vld [vmem:[%s3 + $0x68] sm:$0xff]
    %v113 = vld [vmem:[%s3 + $0x70] sm:$0xff]
    %v114 = vld [vmem:[%s3 + $0x78] sm:$0xff]
    %v115 = vld [vmem:[%s4] sm:$0x1]
    %v117 = vperm.slane %v115, 0
    %119 = vmatpush.msra.mxu0 %v114
    %120 = vmatpush.msra.mxu0 %v113
    %121 = vmatpush.msra.mxu0 %v112
    %122 = vmatpush.msra.mxu0 %v111
    %123 = vmatpush.msra.mxu0 %v110
    %124 = vmatpush.msra.mxu0 %v109
    %125 = vmatpush.msra.mxu0 %v108
    %126 = vmatpush.msra.mxu0 %v107
    %127 = vmatpush.msra.mxu0 %v106
    %128 = vmatpush.msra.mxu0 %v105
    %129 = vmatpush.msra.mxu0 %v104
    %130 = vmatpush.msra.mxu0 %v103
    %131 = vmatpush.msra.mxu0 %v102
    %132 = vmatpush.msra.mxu0 %v101
    %133 = vmatpush.msra.mxu0 %v100
    %134 = vmatpush.msra.mxu0 %v99
    %135 = vmatmul.f32.gmra.mxu0 %v98
    %v136 = vpop.f32.mrf.mxu0
    %v137 = vadd.f32 %v117, %v136
    %138 = vdwg.mxu0
    %v139 = vmax.f32 %v137, 0.0
    %vm140 = vcmask 523264
    %141 = vst.msk [vmem:[#allocation2] sm:$0xff] %vm140, %v139
    // Predicated region
    $region22: #{tpu_custom_call.1} parent=1 // pred_check
      _
    $region23: #{tpu_custom_call.1} parent=1 // pred_check_branch
      %143 = sbr.rel (0) target = $region25
    $region24: #{tpu_custom_call.1} parent=1 // pred_region
      %145 = vsyncadd [#allocation3], 0
      %s147 = sshll.u32 [#allocation2], 4
      %s148 = int_to_ptr.vmem [resolvable:$true] %s147
      %s149 = sshll.u32 %s5, 4
      %s150 = int_to_ptr.hbm [resolvable:$true] %s149
      %152 = dma.vmem_to_hbm [thread:$0]  %s148, 128, %s150, [#allocation3]
    $region25: #{tpu_custom_call.1} parent=1 // pred_fallthru
      _
    // Predicated region
    $region26: #{tpu_custom_call.1} parent=1 // pred_check
      _
    $region27: #{tpu_custom_call.1} parent=1 // pred_check_branch
      %154 = sbr.rel (0) target = $region29
    $region28: #{tpu_custom_call.1} parent=1 // pred_region
      %156 = dma.done [#allocation3], 128
    $region29: #{tpu_custom_call.1} parent=1 // pred_fallthru
      _
    %157 = vsyncpa [#allocation3], 1

// kernel: tpu_custom_call.1
$region0: #{tpu_custom_call.1}
  #allocation0 [shape = 'u32[]', space=smem, size = 0x4, offset = 0x4, fixed_abs, tag = 'smem constant byte address 0x4 - core index']
  #allocation1 [shape = 'u32[72,128]{1,0:T(1,128)}', space=vmem, size = 0x9000, scoped, tag = 'internal scratch']
  %s0 = inlined_call_operand.vmem [shape: f32[8,68], index: 0, kind: input, shape index: {}]
  %s1 = inlined_call_operand.vmem [shape: f32[68,256], index: 1, kind: input, shape index: {}]
  %s2 = inlined_call_operand.vmem [shape: f32[1,256], index: 2, kind: input, shape index: {}]
  %s3 = inlined_call_operand.vmem [shape: f32[128,64], index: 3, kind: input, shape index: {}]
  %s4 = inlined_call_operand.vmem [shape: f32[1,64], index: 4, kind: input, shape index: {}]
  %s5 = inlined_call_operand.hbm [shape: f32[8,64], index: 5, kind: output, shape index: {}]
  %s6 = sld [smem:[#allocation0]]
  $region30: #{tpu_custom_call.1} parent=0
    _
  %s8 = ssub.s32 1, %s6
  %s9 = scalar_select 0, %s8, %s6
  $region1: #{tpu_custom_call.1} parent=0
    #allocation2 [shape = 'u8[4096]{0}', space=vmem, size = 0x1000, scoped, tag = 'output window, operand 0, single buffered']
    #allocation3 [shape = 's32[1]{0}', space=sflag, size = 0x4, scoped, tag = 'scoped memory for tpu_custom_call.1']
    %10 = vsyncpa [#allocation3], 0
    // Predicated region
    $region2: #{tpu_custom_call.1} parent=1 // pred_check
      _
    $region3: #{tpu_custom_call.1} parent=1 // pred_check_branch
      %12 = sbr.rel (0) target = $region5
    $region4: #{tpu_custom_call.1} parent=1 // pred_region
      _
    $region5: #{tpu_custom_call.1} parent=1 // pred_fallthru
      _
    // Predicated region
    $region6: #{tpu_custom_call.1} parent=1 // pred_check
      _
    $region7: #{tpu_custom_call.1} parent=1 // pred_check_branch
      %14 = sbr.rel (0) target = $region9
    $region8: #{tpu_custom_call.1} parent=1 // pred_region
      _
    $region9: #{tpu_custom_call.1} parent=1 // pred_fallthru
      _
    // Predicated region
    $region10: #{tpu_custom_call.1} parent=1 // pred_check
      _
    $region11: #{tpu_custom_call.1} parent=1 // pred_check_branch
      %16 = sbr.rel (0) target = $region13
    $region12: #{tpu_custom_call.1} parent=1 // pred_region
      _
    $region13: #{tpu_custom_call.1} parent=1 // pred_fallthru
      _
    // Predicated region
    $region14: #{tpu_custom_call.1} parent=1 // pred_check
      _
    $region15: #{tpu_custom_call.1} parent=1 // pred_check_branch
      %18 = sbr.rel (0) target = $region17
    $region16: #{tpu_custom_call.1} parent=1 // pred_region
      _
    $region17: #{tpu_custom_call.1} parent=1 // pred_fallthru
      _
    // Predicated region
    $region18: #{tpu_custom_call.1} parent=1 // pred_check
      _
    $region19: #{tpu_custom_call.1} parent=1 // pred_check_branch
      %20 = sbr.rel (0) target = $region21
    $region20: #{tpu_custom_call.1} parent=1 // pred_region
      _
    $region21: #{tpu_custom_call.1} parent=1 // pred_fallthru
      _
    %v21 = vld [vmem:[%s0] sm:$0xff]
    %v22 = vld [vmem:[%s1] sm:$0xff]
    %v23 = vld [vmem:[%s1 + $0x8] sm:$0xff]
    %v24 = vld [vmem:[%s1 + $0x10] sm:$0xff]
    %v25 = vld [vmem:[%s1 + $0x18] sm:$0xff]
    %v26 = vld [vmem:[%s1 + $0x20] sm:$0xff]
    %v27 = vld [vmem:[%s1 + $0x28] sm:$0xff]
    %v28 = vld [vmem:[%s1 + $0x30] sm:$0xff]
    %v29 = vld [vmem:[%s1 + $0x38] sm:$0xff]
    %v30 = vld [vmem:[%s1 + $0x40] sm:$0xff]
    %v31 = vld [vmem:[%s1 + $0x48] sm:$0xff]
    %v32 = vld [vmem:[%s1 + $0x50] sm:$0xff]
    %v33 = vld [vmem:[%s1 + $0x58] sm:$0xff]
    %v34 = vld [vmem:[%s1 + $0x60] sm:$0xff]
    %v35 = vld [vmem:[%s1 + $0x68] sm:$0xff]
    %v36 = vld [vmem:[%s1 + $0x70] sm:$0xff]
    %v37 = vld [vmem:[%s1 + $0x78] sm:$0xff]
    %v38 = vld [vmem:[%s1 + $0x80] sm:$0xf]
    %v39 = vld [vmem:[%s1 + $0x88] sm:$0xf]
    %v40 = vld [vmem:[%s2] sm:$0x3]
    %v42 = vperm.slane %v40, 0
    %v43 = vperm.slane %v40, 1
    %vm46 = vcmask 556032
    %v48 = vsel %vm46, %v21, 0
    %vm50 = vcmask 1043456
    %v52 = vsel %vm50, %v38, 0
    %v55 = vsel %vm50, %v39, 0
    %57 = vmatpush.msra.mxu0 0.0
    %58 = vmatpush.msra.mxu0 0.0
    %59 = vmatpush.msra.mxu0 0.0
    %60 = vmatpush.msra.mxu0 0.0
    %61 = vmatpush.msra.mxu0 0.0
    %62 = vmatpush.msra.mxu0 0.0
    %63 = vmatpush.msra.mxu0 0.0
    %64 = vmatpush.msra.mxu0 %v52
    %65 = vmatpush.msra.mxu0 %v36
    %66 = vmatpush.msra.mxu0 %v34
    %67 = vmatpush.msra.mxu0 %v32
    %68 = vmatpush.msra.mxu0 %v30
    %69 = vmatpush.msra.mxu0 %v28
    %70 = vmatpush.msra.mxu0 %v26
    %71 = vmatpush.msra.mxu0 %v24
    %72 = vmatpush.msra.mxu0 %v22
    %73 = vmatmul.f32.gmra.mxu0 %v48
    %v74 = vpop.f32.mrf.mxu0
    %v75 = vadd.f32 %v42, %v74
    %76 = vdwg.mxu0
    %77 = vmatpush.msra.mxu0 0.0
    %78 = vmatpush.msra.mxu0 0.0
    %79 = vmatpush.msra.mxu0 0.0
    %80 = vmatpush.msra.mxu0 0.0
    %81 = vmatpush.msra.mxu0 0.0
    %82 = vmatpush.msra.mxu0 0.0
    %83 = vmatpush.msra.mxu0 0.0
    %84 = vmatpush.msra.mxu0 %v55
    %85 = vmatpush.msra.mxu0 %v37
    %86 = vmatpush.msra.mxu0 %v35
    %87 = vmatpush.msra.mxu0 %v33
    %88 = vmatpush.msra.mxu0 %v31
    %89 = vmatpush.msra.mxu0 %v29
    %90 = vmatpush.msra.mxu0 %v27
    %91 = vmatpush.msra.mxu0 %v25
    %92 = vmatpush.msra.mxu0 %v23
    %93 = vmatmul.f32.gmra.mxu0 %v48
    %v94 = vpop.f32.mrf.mxu0
    %v95 = vadd.f32 %v43, %v94
    %96 = vdwg.mxu0
    %v97 = vmul.f32 %v75, %v95
    %v98 = vmax.f32 %v97, 0.0
    %v99 = vld [vmem:[%s3] sm:$0xff]
    %v100 = vld [vmem:[%s3 + $0x8] sm:$0xff]
    %v101 = vld [vmem:[%s3 + $0x10] sm:$0xff]
    %v102 = vld [vmem:[%s3 + $0x18] sm:$0xff]
    %v103 = vld [vmem:[%s3 + $0x20] sm:$0xff]
    %v104 = vld [vmem:[%s3 + $0x28] sm:$0xff]
    %v105 = vld [vmem:[%s3 + $0x30] sm:$0xff]
    %v106 = vld [vmem:[%s3 + $0x38] sm:$0xff]
    %v107 = vld [vmem:[%s3 + $0x40] sm:$0xff]
    %v108 = vld [vmem:[%s3 + $0x48] sm:$0xff]
    %v109 = vld [vmem:[%s3 + $0x50] sm:$0xff]
    %v110 = vld [vmem:[%s3 + $0x58] sm:$0xff]
    %v111 = vld [vmem:[%s3 + $0x60] sm:$0xff]
    %v112 = vld [vmem:[%s3 + $0x68] sm:$0xff]
    %v113 = vld [vmem:[%s3 + $0x70] sm:$0xff]
    %v114 = vld [vmem:[%s3 + $0x78] sm:$0xff]
    %v115 = vld [vmem:[%s4] sm:$0x1]
    %v117 = vperm.slane %v115, 0
    %119 = vmatpush.msra.mxu0 %v114
    %120 = vmatpush.msra.mxu0 %v113
    %121 = vmatpush.msra.mxu0 %v112
    %122 = vmatpush.msra.mxu0 %v111
    %123 = vmatpush.msra.mxu0 %v110
    %124 = vmatpush.msra.mxu0 %v109
    %125 = vmatpush.msra.mxu0 %v108
    %126 = vmatpush.msra.mxu0 %v107
    %127 = vmatpush.msra.mxu0 %v106
    %128 = vmatpush.msra.mxu0 %v105
    %129 = vmatpush.msra.mxu0 %v104
    %130 = vmatpush.msra.mxu0 %v103
    %131 = vmatpush.msra.mxu0 %v102
    %132 = vmatpush.msra.mxu0 %v101
    %133 = vmatpush.msra.mxu0 %v100
    %134 = vmatpush.msra.mxu0 %v99
    %135 = vmatmul.f32.gmra.mxu0 %v98
    %v136 = vpop.f32.mrf.mxu0
    %v137 = vadd.f32 %v117, %v136
    %138 = vdwg.mxu0
    %v139 = vmax.f32 %v137, 0.0
    %vm140 = vcmask 523264
    %141 = vst.msk [vmem:[#allocation2] sm:$0xff] %vm140, %v139
    // Predicated region
    $region22: #{tpu_custom_call.1} parent=1 // pred_check
      _
    $region23: #{tpu_custom_call.1} parent=1 // pred_check_branch
      %143 = sbr.rel (0) target = $region25
    $region24: #{tpu_custom_call.1} parent=1 // pred_region
      %145 = vsyncadd [#allocation3], 0
      %s147 = sshll.u32 [#allocation2], 4
      %s148 = int_to_ptr.vmem [resolvable:$true] %s147
      %s149 = sshll.u32 %s5, 4
      %s150 = int_to_ptr.hbm [resolvable:$true] %s149
      %152 = dma.vmem_to_hbm [thread:$0]  %s148, 128, %s150, [#allocation3]
    $region25: #{tpu_custom_call.1} parent=1 // pred_fallthru
      _
    // Predicated region
    $region26: #{tpu_custom_call.1} parent=1 // pred_check
      _
    $region27: #{tpu_custom_call.1} parent=1 // pred_check_branch
      %154 = sbr.rel (0) target = $region29
    $region28: #{tpu_custom_call.1} parent=1 // pred_region
      %156 = dma.done [#allocation3], 128
    $region29: #{tpu_custom_call.1} parent=1 // pred_fallthru
      _
    %157 = vsyncpa [#allocation3], 1

</llo_original>
